<compile_context>
chip_gen: v5e
topology: v5e:2x2
jax: 0.10.0
libtpu: 0.0.40
codegen_flags: <defaults>
</compile_context>

<pallas_src>
import math
import jax
import jax.numpy as jnp
from jax.experimental import pallas as pl
from jax.experimental.pallas import tpu as pltpu


def _round_up(x, m):
    return ((x + m - 1) // m) * m


def make_info_disc_kernel(n_body_linear):
    """Body MLP (ReLU after every body layer == body ReLUs + shared head ReLU) followed
    by ONE fused head matmul producing a lane-dense (tile_n, HPAD) bf16 output slab."""

    def kernel(x_ref, *refs):
        # refs layout:
        #   [0 .. n_body-1]  : body weights W_i  (in, width_p), bf16
        #   [n_body]         : stacked body biases (n_body, width_p), f32
        #   [n_body + 1]     : fused head weight (width_p, HPAD), bf16
        #   [n_body + 2]     : fused head bias   (1, HPAD), f32
        #   [n_body + 3]     : output slab       (tile_n, HPAD), bf16
        w_refs = refs[:n_body_linear]
        bb_ref = refs[n_body_linear]
        wh_ref = refs[n_body_linear + 1]
        bh_ref = refs[n_body_linear + 2]
        out_ref = refs[n_body_linear + 3]

        h = x_ref[...]                                   # f32 (tile_n, in_size)
        for i in range(n_body_linear):
            b = bb_ref[i:i + 1, :]                       # (1, width_p), static slice
            h = jnp.dot(h.astype(jnp.bfloat16), w_refs[i][...],
                        preferred_element_type=jnp.float32) + b
            h = jnp.maximum(h, 0.0)                      # covers the shared head ReLU too

        # Fused heads: (tile_n, width_p) @ (width_p, HPAD) + (1, HPAD) -> lane-dense store.
        out = jnp.dot(h.astype(jnp.bfloat16), wh_ref[...],
                      preferred_element_type=jnp.float32) + bh_ref[...]
        out_ref[...] = out.astype(out_ref.dtype)

    return kernel


def linear_init(key, fan_in, fan_out):
    """PyTorch nn.Linear default init (uniform +-1/sqrt(fan_in)); weight as (in, out)."""
    kw, kb = jax.random.split(key)
    bound = 1.0 / math.sqrt(fan_in)
    w = jax.random.uniform(kw, (fan_in, fan_out), jnp.float32, -bound, bound)
    b = jax.random.uniform(kb, (1, fan_out), jnp.float32, -bound, bound)
    return w, b


def build_params(key, z_size, in_size, width, depth):
    """Weights for InfoDiscriminator(z_size, in_size, width, depth)."""
    body_depth = depth - 1
    n_body_linear = body_depth + 1 if body_depth > 0 else 1
    keys = jax.random.split(key, n_body_linear + 2)

    body = []
    fan_in = in_size
    for i in range(n_body_linear):
        body.append(linear_init(keys[i], fan_in, width))
        fan_in = width

    wd, bd = linear_init(keys[n_body_linear], width, 1)
    wl, bl = linear_init(keys[n_body_linear + 1], width, z_size)
    return body, (wd, bd), (wl, bl)


def _pick_tile_n(N):
    # multiples of 16 keep the bf16 output block layout-friendly
    n16 = _round_up(max(N, 1), 16)
    if n16 <= 256:
        return n16                               # single small tile
    if n16 <= 2048:
        return _round_up((n16 + 1) // 2, 16)     # >= 2 grid steps for v7x's 2 TCs
    return 1024                                  # big tiles amortize per-step overhead


def info_discriminator_forward(x, body_params, disc_params, latent_params):
    N, in_size = x.shape
    width = body_params[-1][0].shape[1]
    z_size = latent_params[0].shape[1]
    n_body = len(body_params)

    width_p = _round_up(width, 128)              # lane-align body/head K,N dims
    hpad = _round_up(1 + z_size, 128)            # fused head lane width (>=128)

    # ---- body weights/biases: pad width to width_p, weights -> bf16 ---------------
    body_ws, body_bs_list = [], []
    for li, (w, b) in enumerate(body_params):
        in_p = in_size if li == 0 else width_p
        wp = jnp.zeros((in_p, width_p), jnp.float32)
        wp = wp.at[: w.shape[0], : w.shape[1]].set(w)
        bp = jnp.zeros((1, width_p), jnp.float32).at[:, :width].set(b)
        body_ws.append(wp.astype(jnp.bfloat16))
        body_bs_list.append(bp)
    body_bs = jnp.concatenate(body_bs_list, axis=0)       # (n_body, width_p), f32

    # ---- fuse the two heads into one lane-dense (width_p, HPAD) matmul ------------
    wd, bd = disc_params
    wl, bl = latent_params
    w_heads = jnp.zeros((width_p, hpad), jnp.float32)
    w_heads = w_heads.at[:width, 0:1].set(wd).at[:width, 1:1 + z_size].set(wl)
    w_heads = w_heads.astype(jnp.bfloat16)
    b_heads = jnp.zeros((1, hpad), jnp.float32)
    b_heads = b_heads.at[:, 0:1].set(bd).at[:, 1:1 + z_size].set(bl)

    # ---- batch grid (parallel), ragged last block handled by Pallas masking -------
    tile_n = _pick_tile_n(N)
    grid = (pl.cdiv(N, tile_n),)

    def const_spec(arr):
        # whole array resident, single-buffered (never changes across grid steps)
        return pl.BlockSpec(arr.shape, lambda i: (0, 0), pipeline_mode=pl.Buffered(1))

    in_specs = [pl.BlockSpec((tile_n, in_size), lambda i: (i, 0))]
    in_specs += [const_spec(w) for w in body_ws]
    in_specs += [const_spec(body_bs), const_spec(w_heads), const_spec(b_heads)]
    out_specs = pl.BlockSpec((tile_n, hpad), lambda i: (i, 0))

    # ---- VMEM budget (single-buffered weights) + cost estimate --------------------
    weight_bytes = (2 * (sum(w.size for w in body_ws) + w_heads.size)
                    + 4 * (body_bs.size + b_heads.size))
    io_bytes = 2 * tile_n * in_size * 4 + 2 * tile_n * hpad * 2    # dbl-buffered x / out
    act_bytes = 4 * tile_n * max(width_p, hpad, in_size) * 4       # f32 intermediates
    need = weight_bytes + io_bytes + act_bytes
    try:
        vmem_cap = pltpu.get_tpu_info().vmem_capacity_bytes
    except Exception:
        vmem_cap = 64 << 20                                        # v7x per-TC worst case
    vmem_limit = min(max(int(1.5 * need), 32 << 20), int(0.75 * vmem_cap))

    flops = 2 * N * (in_size * width_p
                     + (n_body - 1) * width_p * width_p
                     + width_p * hpad)
    bytes_accessed = 4 * x.size + weight_bytes + 2 * N * hpad

    heads = pl.pallas_call(
        make_info_disc_kernel(n_body),
        out_shape=jax.ShapeDtypeStruct((N, hpad), jnp.bfloat16),
        grid_spec=pltpu.PrefetchScalarGridSpec(
            num_scalar_prefetch=0,
            grid=grid,
            in_specs=in_specs,
            out_specs=out_specs,
        ),
        compiler_params=pltpu.CompilerParams(
            dimension_semantics=("parallel",),
            vmem_limit_bytes=vmem_limit,
        ),
        cost_estimate=pl.CostEstimate(
            flops=flops, transcendentals=0, bytes_accessed=bytes_accessed
        ),
    )(x, *body_ws, body_bs, w_heads, b_heads)

    disc = jnp.mean(heads[:, 0].astype(jnp.float32)).reshape(1)    # .mean(0).view(1)
    latent = heads[:, 1:1 + z_size].astype(jnp.float32)            # (N, z_size)
    return disc, latent


def reference_forward(x, body_params, disc_params, latent_params):
    h = x
    n = len(body_params)
    for i, (w, b) in enumerate(body_params):
        h = h @ w + b
        if i < n - 1:
            h = jnp.maximum(h, 0.0)
    hr = jnp.maximum(h, 0.0)
    d = (hr @ disc_params[0] + disc_params[1]).mean(0).reshape(1)
    lat = hr @ latent_params[0] + latent_params[1]
    return d, lat


if __name__ == "__main__":
    # Small shapes consistent with the module's forward: samples is (N, in_size).
    N, in_size, width, z_size, depth = 8, 32, 32, 4, 2

    key = jax.random.PRNGKey(0)
    k_params, k_x = jax.random.split(key)

    body_params, disc_params, latent_params = build_params(
        k_params, z_size, in_size, width, depth
    )
    x = jax.random.normal(k_x, (N, in_size), jnp.float32)

    disc_out, latent_out = info_discriminator_forward(
        x, body_params, disc_params, latent_params
    )
    jax.block_until_ready((disc_out, latent_out))

    # Sanity-check against a pure-JAX f32 reference (bf16 MXU path -> looser tolerance).
    d_ref, l_ref = reference_forward(x, body_params, disc_params, latent_params)
    assert disc_out.shape == (1,)
    assert latent_out.shape == (N, z_size)
    assert jnp.allclose(disc_out, d_ref, atol=5e-2, rtol=5e-2)
    assert jnp.allclose(latent_out, l_ref, atol=5e-2, rtol=5e-2)

    print("KERNEL_OK")
</pallas_src>

<mosaic_0001>
module attributes {stable_mosaic.version = 11 : i64} {
  func.func @kernel(%arg0: i32, %arg1: memref<16x32xf32, #tpu.memory_space<vmem>>, %arg2: memref<32x128xbf16, #tpu.memory_space<vmem>>, %arg3: memref<128x128xbf16, #tpu.memory_space<vmem>>, %arg4: memref<2x128xf32, #tpu.memory_space<vmem>>, %arg5: memref<128x128xbf16, #tpu.memory_space<vmem>>, %arg6: memref<1x128xf32, #tpu.memory_space<vmem>>, %arg7: memref<16x128xbf16, #tpu.memory_space<vmem>>) attributes {dimension_semantics = [#tpu.dimension_semantics<parallel>], iteration_bounds = array<i64: 1>, scalar_prefetch = 0 : i64, scratch_operands = 0 : i64, tpu.core_type = #tpu.core_type<tc>, window_params = [{transform_indices = @transform_0, window_bounds = array<i64: 16, 32>}, {pipeline_mode = #tpu.pipeline_mode<synchronous>, transform_indices = @transform_1, window_bounds = array<i64: 32, 128>}, {pipeline_mode = #tpu.pipeline_mode<synchronous>, transform_indices = @transform_2, window_bounds = array<i64: 128, 128>}, {pipeline_mode = #tpu.pipeline_mode<synchronous>, transform_indices = @transform_3, window_bounds = array<i64: 2, 128>}, {pipeline_mode = #tpu.pipeline_mode<synchronous>, transform_indices = @transform_4, window_bounds = array<i64: 128, 128>}, {pipeline_mode = #tpu.pipeline_mode<synchronous>, transform_indices = @transform_5, window_bounds = array<i64: 1, 128>}, {transform_indices = @transform_6, window_bounds = array<i64: 16, 128>}]} {
    %c0 = arith.constant 0 : index
    %c0_0 = arith.constant 0 : index
    %0 = vector.load %arg1[%c0, %c0_0] : memref<16x32xf32, #tpu.memory_space<vmem>>, vector<16x32xf32>
    %c0_1 = arith.constant 0 : index
    %c0_2 = arith.constant 0 : index
    %1 = vector.load %arg4[%c0_1, %c0_2] : memref<2x128xf32, #tpu.memory_space<vmem>>, vector<1x128xf32>
    %2 = arith.truncf %0 : vector<16x32xf32> to vector<16x32xbf16>
    %c0_3 = arith.constant 0 : index
    %c0_4 = arith.constant 0 : index
    %3 = vector.load %arg2[%c0_3, %c0_4] : memref<32x128xbf16, #tpu.memory_space<vmem>>, vector<32x128xbf16>
    %cst = arith.constant dense<0.000000e+00> : vector<16x128xf32>
    %4 = tpu.matmul %2, %3, %cst {dimension_numbers = #tpu.dot_dimension_numbers<[1], [0], [0], [1], [0, 0, 1, 1], [], []>} : vector<16x32xbf16>, vector<32x128xbf16>, vector<16x128xf32> -> vector<16x128xf32>
    %5 = vector.broadcast %1 : vector<1x128xf32> to vector<16x128xf32>
    %6 = arith.addf %4, %5 : vector<16x128xf32>
    %cst_5 = arith.constant 0.000000e+00 : f32
    %7 = vector.broadcast %cst_5 : f32 to vector<16x128xf32>
    %8 = arith.maximumf %6, %7 : vector<16x128xf32>
    %c1 = arith.constant 1 : index
    %c0_6 = arith.constant 0 : index
    %9 = vector.load %arg4[%c1, %c0_6] : memref<2x128xf32, #tpu.memory_space<vmem>>, vector<1x128xf32>
    %10 = arith.truncf %8 : vector<16x128xf32> to vector<16x128xbf16>
    %c0_7 = arith.constant 0 : index
    %c0_8 = arith.constant 0 : index
    %11 = vector.load %arg3[%c0_7, %c0_8] : memref<128x128xbf16, #tpu.memory_space<vmem>>, vector<128x128xbf16>
    %cst_9 = arith.constant dense<0.000000e+00> : vector<16x128xf32>
    %12 = tpu.matmul %10, %11, %cst_9 {dimension_numbers = #tpu.dot_dimension_numbers<[1], [0], [0], [1], [0, 0, 1, 1], [], []>} : vector<16x128xbf16>, vector<128x128xbf16>, vector<16x128xf32> -> vector<16x128xf32>
    %13 = vector.broadcast %9 : vector<1x128xf32> to vector<16x128xf32>
    %14 = arith.addf %12, %13 : vector<16x128xf32>
    %cst_10 = arith.constant 0.000000e+00 : f32
    %15 = vector.broadcast %cst_10 : f32 to vector<16x128xf32>
    %16 = arith.maximumf %14, %15 : vector<16x128xf32>
    %17 = arith.truncf %16 : vector<16x128xf32> to vector<16x128xbf16>
    %c0_11 = arith.constant 0 : index
    %c0_12 = arith.constant 0 : index
    %18 = vector.load %arg5[%c0_11, %c0_12] : memref<128x128xbf16, #tpu.memory_space<vmem>>, vector<128x128xbf16>
    %cst_13 = arith.constant dense<0.000000e+00> : vector<16x128xf32>
    %19 = tpu.matmul %17, %18, %cst_13 {dimension_numbers = #tpu.dot_dimension_numbers<[1], [0], [0], [1], [0, 0, 1, 1], [], []>} : vector<16x128xbf16>, vector<128x128xbf16>, vector<16x128xf32> -> vector<16x128xf32>
    %c0_14 = arith.constant 0 : index
    %c0_15 = arith.constant 0 : index
    %20 = vector.load %arg6[%c0_14, %c0_15] : memref<1x128xf32, #tpu.memory_space<vmem>>, vector<1x128xf32>
    %21 = vector.broadcast %20 : vector<1x128xf32> to vector<16x128xf32>
    %22 = arith.addf %19, %21 : vector<16x128xf32>
    %23 = arith.truncf %22 : vector<16x128xf32> to vector<16x128xbf16>
    %c0_16 = arith.constant 0 : index
    %c0_17 = arith.constant 0 : index
    %24 = vector.load %arg7[%c0_16, %c0_17] : memref<16x128xbf16, #tpu.memory_space<vmem>>, vector<16x128xbf16>
    tpu.vector_store %arg7[%c0_16, %c0_17], %23 {strides = array<i32>} : memref<16x128xbf16, #tpu.memory_space<vmem>>, vector<16x128xbf16>,
    return
  }
  func.func @transform_0(%arg0: i32) -> (i32, i32) {
    %c0_i32 = arith.constant 0 : i32
    %c0_i32_0 = arith.constant 0 : i32
    return %arg0, %c0_i32 : i32, i32
  }
  func.func @transform_1(%arg0: i32) -> (i32, i32) {
    %c0_i32 = arith.constant 0 : i32
    %c0_i32_0 = arith.constant 0 : i32
    %c0_i32_1 = arith.constant 0 : i32
    return %c0_i32, %c0_i32_0 : i32, i32
  }
  func.func @transform_2(%arg0: i32) -> (i32, i32) {
    %c0_i32 = arith.constant 0 : i32
    %c0_i32_0 = arith.constant 0 : i32
    %c0_i32_1 = arith.constant 0 : i32
    return %c0_i32, %c0_i32_0 : i32, i32
  }
  func.func @transform_3(%arg0: i32) -> (i32, i32) {
    %c0_i32 = arith.constant 0 : i32
    %c0_i32_0 = arith.constant 0 : i32
    %c0_i32_1 = arith.constant 0 : i32
    return %c0_i32, %c0_i32_0 : i32, i32
  }
  func.func @transform_4(%arg0: i32) -> (i32, i32) {
    %c0_i32 = arith.constant 0 : i32
    %c0_i32_0 = arith.constant 0 : i32
    %c0_i32_1 = arith.constant 0 : i32
    return %c0_i32, %c0_i32_0 : i32, i32
  }
  func.func @transform_5(%arg0: i32) -> (i32, i32) {
    %c0_i32 = arith.constant 0 : i32
    %c0_i32_0 = arith.constant 0 : i32
    %c0_i32_1 = arith.constant 0 : i32
    return %c0_i32, %c0_i32_0 : i32, i32
  }
  func.func @transform_6(%arg0: i32) -> (i32, i32) {
    %c0_i32 = arith.constant 0 : i32
    %c0_i32_0 = arith.constant 0 : i32
    return %arg0, %c0_i32 : i32, i32
  }
}

</mosaic_0001>

<llo_original>
// kernel: tpu_custom_call.1
$region0: #{tpu_custom_call.1}
  #allocation0 [shape = 'u32[]', space=smem, size = 0x4, offset = 0x4, fixed_abs, tag = 'smem constant byte address 0x4 - core index']
  #allocation1 [shape = 'u32[72,128]{1,0:T(1,128)}', space=vmem, size = 0x9000, scoped, tag = 'internal scratch']
  %s0 = inlined_call_operand.hbm [shape: f32[8,32], index: 0, kind: input, shape index: {}]
  %s1 = inlined_call_operand.hbm [shape: bf16[32,128], index: 1, kind: input, shape index: {}]
  %s2 = inlined_call_operand.hbm [shape: bf16[128,128], index: 2, kind: input, shape index: {}]
  %s3 = inlined_call_operand.vmem [shape: f32[2,128], index: 3, kind: input, shape index: {}]
  %s4 = inlined_call_operand.hbm [shape: bf16[128,128], index: 4, kind: input, shape index: {}]
  %s5 = inlined_call_operand.vmem [shape: f32[1,128], index: 5, kind: input, shape index: {}]
  %s6 = inlined_call_operand.hbm [shape: bf16[8,128], index: 6, kind: output, shape index: {}]
  %s7 = sld [smem:[#allocation0]]
  $region50: #{tpu_custom_call.1} parent=0
    _
  %s9 = ssub.s32 1, %s7
  %s10 = scalar_select 0, %s9, %s7
  $region1: #{tpu_custom_call.1} parent=0
    #allocation2 [shape = 'u8[8192]{0}', space=vmem, size = 0x2000, scoped, tag = 'input window, operand 0, single buffered']
    #allocation3 [shape = 's32[1]{0}', space=sflag, size = 0x4, scoped, tag = 'scoped memory for tpu_custom_call.1']
    #allocation4 [shape = 's32[1]{0}', space=sflag, size = 0x4, scoped, tag = 'scoped memory for tpu_custom_call.1']
    #allocation5 [shape = 'u8[8192]{0}', space=vmem, size = 0x2000, scoped, tag = 'input window, operand 1, single buffered']
    #allocation6 [shape = 's32[1]{0}', space=sflag, size = 0x4, scoped, tag = 'scoped memory for tpu_custom_call.1']
    #allocation7 [shape = 'u8[32768]{0}', space=vmem, size = 0x8000, scoped, tag = 'input window, operand 2, single buffered']
    #allocation8 [shape = 'u8[32768]{0}', space=vmem, size = 0x8000, scoped, tag = 'input window, operand 4, single buffered']
    #allocation9 [shape = 's32[1]{0}', space=sflag, size = 0x4, scoped, tag = 'scoped memory for tpu_custom_call.1']
    #allocation10 [shape = 'u8[4096]{0}', space=vmem, size = 0x1000, scoped, tag = 'output window, operand 0, single buffered']
    %11 = vsyncpa [#allocation3], 0
    %12 = vsyncpa [#allocation6], 0
    %13 = vsyncpa [#allocation9], 0
    %14 = vsyncpa [#allocation4], 0
    // Predicated region
    $region2: #{tpu_custom_call.1} parent=1 // pred_check
      _
    $region3: #{tpu_custom_call.1} parent=1 // pred_check_branch
      %16 = sbr.rel (0) target = $region5
    $region4: #{tpu_custom_call.1} parent=1 // pred_region
      %18 = vsyncadd [#allocation3], 128
      %s19 = sshll.u32 %s0, 4
      %s20 = int_to_ptr.hbm [resolvable:$true] %s19
      %s21 = sshll.u32 [#allocation2], 4
      %s22 = int_to_ptr.vmem [resolvable:$true] %s21
      %27 = dma.hbm_to_vmem [thread:$0]  %s20, 128, %s22, [#allocation3], 128, 128, 8
    $region5: #{tpu_custom_call.1} parent=1 // pred_fallthru
      _
    // Predicated region
    $region6: #{tpu_custom_call.1} parent=1 // pred_check
      _
    $region7: #{tpu_custom_call.1} parent=1 // pred_check_branch
      %29 = sbr.rel (0) target = $region9
    $region8: #{tpu_custom_call.1} parent=1 // pred_region
      %31 = vsyncadd [#allocation6], 0
      %s32 = sshll.u32 %s1, 4
      %s33 = int_to_ptr.hbm [resolvable:$true] %s32
      %s34 = sshll.u32 [#allocation5], 4
      %s35 = int_to_ptr.vmem [resolvable:$true] %s34
      %40 = dma.hbm_to_vmem [thread:$0]  %s33, 256, %s35, [#allocation6], 64, 64, 4
    $region9: #{tpu_custom_call.1} parent=1 // pred_fallthru
      _
    // Predicated region
    $region10: #{tpu_custom_call.1} parent=1 // pred_check
      _
    $region11: #{tpu_custom_call.1} parent=1 // pred_check_branch
      %42 = sbr.rel (0) target = $region13
    $region12: #{tpu_custom_call.1} parent=1 // pred_region
      %44 = vsyncadd [#allocation6], 0
      %s45 = sshll.u32 %s2, 4
      %s46 = int_to_ptr.hbm [resolvable:$true] %s45
      %s47 = sshll.u32 [#allocation7], 4
      %s48 = int_to_ptr.vmem [resolvable:$true] %s47
      %53 = dma.hbm_to_vmem [thread:$0]  %s46, 1024, %s48, [#allocation6], 64, 64, 4
    $region13: #{tpu_custom_call.1} parent=1 // pred_fallthru
      _
    // Predicated region
    $region14: #{tpu_custom_call.1} parent=1 // pred_check
      _
    $region15: #{tpu_custom_call.1} parent=1 // pred_check_branch
      %55 = sbr.rel (0) target = $region17
    $region16: #{tpu_custom_call.1} parent=1 // pred_region
      _
    $region17: #{tpu_custom_call.1} parent=1 // pred_fallthru
      _
    // Predicated region
    $region18: #{tpu_custom_call.1} parent=1 // pred_check
      _
    $region19: #{tpu_custom_call.1} parent=1 // pred_check_branch
      %57 = sbr.rel (0) target = $region21
    $region20: #{tpu_custom_call.1} parent=1 // pred_region
      %59 = vsyncadd [#allocation9], 0
      %s60 = sshll.u32 %s4, 4
      %s61 = int_to_ptr.hbm [resolvable:$true] %s60
      %s62 = sshll.u32 [#allocation8], 4
      %s63 = int_to_ptr.vmem [resolvable:$true] %s62
      %68 = dma.hbm_to_vmem [thread:$0]  %s61, 1024, %s63, [#allocation9], 64, 64, 4
    $region21: #{tpu_custom_call.1} parent=1 // pred_fallthru
      _
    // Predicated region
    $region22: #{tpu_custom_call.1} parent=1 // pred_check
      _
    $region23: #{tpu_custom_call.1} parent=1 // pred_check_branch
      %70 = sbr.rel (0) target = $region25
    $region24: #{tpu_custom_call.1} parent=1 // pred_region
      _
    $region25: #{tpu_custom_call.1} parent=1 // pred_fallthru
      _
    // Predicated region
    $region26: #{tpu_custom_call.1} parent=1 // pred_check
      _
    $region27: #{tpu_custom_call.1} parent=1 // pred_check_branch
      %72 = sbr.rel (0) target = $region29
    $region28: #{tpu_custom_call.1} parent=1 // pred_region
      %74 = dma.done [#allocation3], 256
    $region29: #{tpu_custom_call.1} parent=1 // pred_fallthru
      _
    // Predicated region
    $region30: #{tpu_custom_call.1} parent=1 // pred_check
      _
    $region31: #{tpu_custom_call.1} parent=1 // pred_check_branch
      %76 = sbr.rel (0) target = $region33
    $region32: #{tpu_custom_call.1} parent=1 // pred_region
      %78 = dma.done [#allocation6], 256
    $region33: #{tpu_custom_call.1} parent=1 // pred_fallthru
      _
    // Predicated region
    $region34: #{tpu_custom_call.1} parent=1 // pred_check
      _
    $region35: #{tpu_custom_call.1} parent=1 // pred_check_branch
      %80 = sbr.rel (0) target = $region37
    $region36: #{tpu_custom_call.1} parent=1 // pred_region
      %82 = dma.done [#allocation6], 1024
    $region37: #{tpu_custom_call.1} parent=1 // pred_fallthru
      _
    // Predicated region
    $region38: #{tpu_custom_call.1} parent=1 // pred_check
      _
    $region39: #{tpu_custom_call.1} parent=1 // pred_check_branch
      %84 = sbr.rel (0) target = $region41
    $region40: #{tpu_custom_call.1} parent=1 // pred_region
      %86 = dma.done [#allocation9], 1024
    $region41: #{tpu_custom_call.1} parent=1 // pred_fallthru
      _
    %v88 = vld [vmem:[#allocation2] sm:$0xff]
    %v89 = vld [vmem:[#allocation2 + $0x8] sm:$0xff]
    %v90 = vld [vmem:[%s3] sm:$0x1]
    %v91 = vpack.c.bf16 %v89, %v88
    %v92 = vld [vmem:[#allocation5] sm:$0xf]
    %v93 = vld [vmem:[#allocation5 + $0x4] sm:$0xf]
    %v94 = vld [vmem:[#allocation5 + $0x8] sm:$0xf]
    %v95 = vld [vmem:[#allocation5 + $0xc] sm:$0xf]
    %v96 = vperm.slane %v90, 0
    %v101 = vunpack.c.l.b16 %v92
    %v102 = vunpack.c.l.b16 %v93
    %v103 = vunpack.c.l.b16 %v94
    %v104 = vunpack.c.l.b16 %v95
    %v105 = vpack.c.b16 %v102, %v101
    %v106 = vpack.c.b16 %v104, %v103
    %vm109 = vcmask 261120
    %v111 = vsel %vm109, %v91, 0
    %113 = vmatpush.bf16.msra.mxu0 0
    %114 = vmatpush.bf16.msra.mxu0 0
    %115 = vmatpush.bf16.msra.mxu0 0
    %116 = vmatpush.bf16.msra.mxu0 0
    %117 = vmatpush.bf16.msra.mxu0 0
    %118 = vmatpush.bf16.msra.mxu0 0
    %119 = vmatpush.bf16.msra.mxu0 %v106
    %120 = vmatpush.bf16.msra.mxu0 %v105
    %121 = vmatmul.bf16.gmra.mxu0 %v111
    %v122 = vpop.f32.mrf.mxu0
    %v123 = vadd.f32 %v96, %v122
    %v124 = vpop.f32.mrf.mxu0
    %v125 = vadd.f32 %v96, %v124
    %126 = vdwg.mxu0
    %v127 = vmax.f32 %v123, 0.0
    %v128 = vmax.f32 %v125, 0.0
    %v129 = vld [vmem:[%s3 + $0x1] sm:$0x1]
    %v130 = vpack.c.bf16 %v128, %v127
    %v131 = vld [vmem:[#allocation7] sm:$0xf]
    %v132 = vld [vmem:[#allocation7 + $0x4] sm:$0xf]
    %v133 = vld [vmem:[#allocation7 + $0x8] sm:$0xf]
    %v134 = vld [vmem:[#allocation7 + $0xc] sm:$0xf]
    %v135 = vld [vmem:[#allocation7 + $0x10] sm:$0xf]
    %v136 = vld [vmem:[#allocation7 + $0x14] sm:$0xf]
    %v137 = vld [vmem:[#allocation7 + $0x18] sm:$0xf]
    %v138 = vld [vmem:[#allocation7 + $0x1c] sm:$0xf]
    %v139 = vld [vmem:[#allocation7 + $0x20] sm:$0xf]
    %v140 = vld [vmem:[#allocation7 + $0x24] sm:$0xf]
    %v141 = vld [vmem:[#allocation7 + $0x28] sm:$0xf]
    %v142 = vld [vmem:[#allocation7 + $0x2c] sm:$0xf]
    %v143 = vld [vmem:[#allocation7 + $0x30] sm:$0xf]
    %v144 = vld [vmem:[#allocation7 + $0x34] sm:$0xf]
    %v145 = vld [vmem:[#allocation7 + $0x38] sm:$0xf]
    %v146 = vld [vmem:[#allocation7 + $0x3c] sm:$0xf]
    %v147 = vperm.slane %v129, 0
    %v164 = vunpack.c.l.b16 %v131
    %v165 = vunpack.c.l.b16 %v132
    %v166 = vunpack.c.l.b16 %v133
    %v167 = vunpack.c.l.b16 %v134
    %v168 = vunpack.c.l.b16 %v135
    %v169 = vunpack.c.l.b16 %v136
    %v170 = vunpack.c.l.b16 %v137
    %v171 = vunpack.c.l.b16 %v138
    %v172 = vunpack.c.l.b16 %v139
    %v173 = vunpack.c.l.b16 %v140
    %v174 = vunpack.c.l.b16 %v141
    %v175 = vunpack.c.l.b16 %v142
    %v176 = vunpack.c.l.b16 %v143
    %v177 = vunpack.c.l.b16 %v144
    %v178 = vunpack.c.l.b16 %v145
    %v179 = vunpack.c.l.b16 %v146
    %v180 = vpack.c.b16 %v165, %v164
    %v181 = vpack.c.b16 %v167, %v166
    %v182 = vpack.c.b16 %v169, %v168
    %v183 = vpack.c.b16 %v171, %v170
    %v184 = vpack.c.b16 %v173, %v172
    %v185 = vpack.c.b16 %v175, %v174
    %v186 = vpack.c.b16 %v177, %v176
    %v187 = vpack.c.b16 %v179, %v178
    %196 = vmatpush.bf16.msra.mxu0 %v187
    %197 = vmatpush.bf16.msra.mxu0 %v186
    %198 = vmatpush.bf16.msra.mxu0 %v185
    %199 = vmatpush.bf16.msra.mxu0 %v184
    %200 = vmatpush.bf16.msra.mxu0 %v183
    %201 = vmatpush.bf16.msra.mxu0 %v182
    %202 = vmatpush.bf16.msra.mxu0 %v181
    %203 = vmatpush.bf16.msra.mxu0 %v180
    %204 = vmatmul.bf16.gmra.mxu0 %v130
    %v205 = vpop.f32.mrf.mxu0
    %v206 = vadd.f32 %v147, %v205
    %v207 = vpop.f32.mrf.mxu0
    %v208 = vadd.f32 %v147, %v207
    %209 = vdwg.mxu0
    %v210 = vmax.f32 %v206, 0.0
    %v211 = vmax.f32 %v208, 0.0
    %v212 = vpack.c.bf16 %v211, %v210
    %v213 = vld [vmem:[#allocation8] sm:$0xf]
    %v214 = vld [vmem:[#allocation8 + $0x4] sm:$0xf]
    %v215 = vld [vmem:[#allocation8 + $0x8] sm:$0xf]
    %v216 = vld [vmem:[#allocation8 + $0xc] sm:$0xf]
    %v217 = vld [vmem:[#allocation8 + $0x10] sm:$0xf]
    %v218 = vld [vmem:[#allocation8 + $0x14] sm:$0xf]
    %v219 = vld [vmem:[#allocation8 + $0x18] sm:$0xf]
    %v220 = vld [vmem:[#allocation8 + $0x1c] sm:$0xf]
    %v221 = vld [vmem:[#allocation8 + $0x20] sm:$0xf]
    %v222 = vld [vmem:[#allocation8 + $0x24] sm:$0xf]
    %v223 = vld [vmem:[#allocation8 + $0x28] sm:$0xf]
    %v224 = vld [vmem:[#allocation8 + $0x2c] sm:$0xf]
    %v225 = vld [vmem:[#allocation8 + $0x30] sm:$0xf]
    %v226 = vld [vmem:[#allocation8 + $0x34] sm:$0xf]
    %v227 = vld [vmem:[#allocation8 + $0x38] sm:$0xf]
    %v228 = vld [vmem:[#allocation8 + $0x3c] sm:$0xf]
    %v229 = vld [vmem:[%s5] sm:$0x1]
    %v231 = vperm.slane %v229, 0
    %v249 = vunpack.c.l.b16 %v213
    %v250 = vunpack.c.l.b16 %v214
    %v251 = vunpack.c.l.b16 %v215
    %v252 = vunpack.c.l.b16 %v216
    %v253 = vunpack.c.l.b16 %v217
    %v254 = vunpack.c.l.b16 %v218
    %v255 = vunpack.c.l.b16 %v219
    %v256 = vunpack.c.l.b16 %v220
    %v257 = vunpack.c.l.b16 %v221
    %v258 = vunpack.c.l.b16 %v222
    %v259 = vunpack.c.l.b16 %v223
    %v260 = vunpack.c.l.b16 %v224
    %v261 = vunpack.c.l.b16 %v225
    %v262 = vunpack.c.l.b16 %v226
    %v263 = vunpack.c.l.b16 %v227
    %v264 = vunpack.c.l.b16 %v228
    %v265 = vpack.c.b16 %v250, %v249
    %v266 = vpack.c.b16 %v252, %v251
    %v267 = vpack.c.b16 %v254, %v253
    %v268 = vpack.c.b16 %v256, %v255
    %v269 = vpack.c.b16 %v258, %v257
    %v270 = vpack.c.b16 %v260, %v259
    %v271 = vpack.c.b16 %v262, %v261
    %v272 = vpack.c.b16 %v264, %v263
    %281 = vmatpush.bf16.msra.mxu0 %v272
    %282 = vmatpush.bf16.msra.mxu0 %v271
    %283 = vmatpush.bf16.msra.mxu0 %v270
    %284 = vmatpush.bf16.msra.mxu0 %v269
    %285 = vmatpush.bf16.msra.mxu0 %v268
    %286 = vmatpush.bf16.msra.mxu0 %v267
    %287 = vmatpush.bf16.msra.mxu0 %v266
    %288 = vmatpush.bf16.msra.mxu0 %v265
    %289 = vmatmul.bf16.gmra.mxu0 %v212
    %v290 = vpop.f32.mrf.mxu0
    %v291 = vadd.f32 %v231, %v290
    %v292 = vpop.f32.mrf.mxu0
    %v293 = vadd.f32 %v231, %v292
    %294 = vdwg.mxu0
    %v295 = vpack.c.bf16 %v291, %v291
    %v296 = vpack.c.bf16 %v293, %v293
    %297 = vst [vmem:[#allocation10] sm:$0xf] %v295
    %298 = vst [vmem:[#allocation10 + $0x4] sm:$0xf] %v296
    // Predicated region
    $region42: #{tpu_custom_call.1} parent=1 // pred_check
      _
    $region43: #{tpu_custom_call.1} parent=1 // pred_check_branch
      %300 = sbr.rel (0) target = $region45
    $region44: #{tpu_custom_call.1} parent=1 // pred_region
      %302 = vsyncadd [#allocation4], 64
      %s303 = sshll.u32 [#allocation10], 4
      %s304 = int_to_ptr.vmem [resolvable:$true] %s303
      %s305 = sshll.u32 %s6, 4
      %s306 = int_to_ptr.hbm [resolvable:$true] %s305
      %311 = dma.vmem_to_hbm [thread:$0]  %s304, 64, %s306, [#allocation4], 64, 64, 4
    $region45: #{tpu_custom_call.1} parent=1 // pred_fallthru
      _
    // Predicated region
    $region46: #{tpu_custom_call.1} parent=1 // pred_check
      _
    $region47: #{tpu_custom_call.1} parent=1 // pred_check_branch
      %313 = sbr.rel (0) target = $region49
    $region48: #{tpu_custom_call.1} parent=1 // pred_region
      %315 = dma.done [#allocation4], 128
    $region49: #{tpu_custom_call.1} parent=1 // pred_fallthru
      _
    %316 = vsyncpa [#allocation3], 1
    %317 = vsyncpa [#allocation6], 1
    %318 = vsyncpa [#allocation9], 1
    %319 = vsyncpa [#allocation4], 1

</llo_original>
